<compile_context>
chip_gen: v7x
topology: tpu7x:2x2x1
jax: 0.10.0
libtpu: 0.0.40
codegen_flags: <defaults>
</compile_context>

<pallas_src>
import functools

import jax
import jax.numpy as jnp
from jax.experimental import pallas as pl
from jax.experimental.pallas import tpu as pltpu


def _rmsnorm_kernel(x_ref, scale_ref, *rest, eps, inv_d, has_shift):
    if has_shift:
        shift_ref, o_ref = rest
    else:
        (o_ref,) = rest

    # qwen3_compatible=True: compute in float32 regardless of input dtype.
    x = x_ref[...].astype(jnp.float32)                      # (TM, D), one convert
    var = jnp.sum(x * x, axis=-1, keepdims=True) * inv_d    # square + XLU reduce
    inv = jax.lax.rsqrt(var + eps)                          # EUP rsqrt
    y = (x * inv) * scale_ref[...]                          # two VALU muls (fp32)
    if has_shift:
        y = y + shift_ref[...]
    o_ref[...] = y.astype(o_ref.dtype)                      # cast back on store


def _round_up(x, m):
    return ((x + m - 1) // m) * m


def _physical_vmem_bytes():
    """Per-core physical VMEM; conservative v7x fallback if query unavailable."""
    try:
        return int(pltpu.get_tpu_info().vmem_capacity_bytes)
    except Exception:
        return 64 << 20  # v7x has the smallest VMEM; safe on all generations


def _choose_row_tile(n_rows, emb_dim, itemsize, vmem_budget_bytes):
    """Largest row tile (multiple of 16) fitting the VMEM budget, while keeping
    enough grid steps for DMA/compute overlap (and megacore sharding on v7x)."""
    # Per-row cost: double-buffered input + double-buffered output (auto
    # pipelining) plus the fp32 intermediates materialized in the body.
    bytes_per_row = emb_dim * (2 * itemsize + 2 * itemsize + 2 * 4)
    tile = max(16, vmem_budget_bytes // bytes_per_row)
    tile = min(tile, 1024)                       # BW plateau ~512-1024 rows
    if n_rows > 16:
        # Target >= 8 grid steps (>= 4 per TensorCore on v7x) so the pipeline
        # overlaps DMA with compute; per-step overhead is only ~0.35 us.
        tile = min(tile, _round_up(pl.cdiv(n_rows, 8), 16))
    tile = min(tile, _round_up(n_rows, 16))      # don't tile past the data
    tile = max(16, (tile // 16) * 16)            # sublane-safe (bf16 packing)
    return tile


def rmsnorm(x, scale, shift=None, *, eps=1e-6, row_tile=None):
    """RMSNorm over the last axis of x. scale/shift have shape (emb_dim,)."""
    orig_shape = x.shape
    emb_dim = orig_shape[-1]
    x2d = x.reshape(-1, emb_dim)
    n_rows = x2d.shape[0]

    itemsize = jnp.dtype(x.dtype).itemsize
    phys_vmem = _physical_vmem_bytes()
    if row_tile is None:
        row_tile = _choose_row_tile(n_rows, emb_dim, itemsize,
                                    vmem_budget_bytes=phys_vmem // 2)
    else:
        row_tile = max(16, _round_up(int(row_tile), 16))

    grid = pl.cdiv(n_rows, row_tile)  # partial tail block handled by Pallas

    scale2d = scale.reshape(1, emb_dim).astype(jnp.float32)
    has_shift = shift is not None

    # Explicit scoped-VMEM budget, capped below physical VMEM (v7x: 64 MiB).
    tile_elems = row_tile * emb_dim
    footprint = (2 * tile_elems * itemsize      # input, double-buffered
                 + 2 * tile_elems * itemsize    # output, double-buffered
                 + 2 * tile_elems * 4           # fp32 intermediates
                 + 4 * emb_dim * 4)             # scale (+ shift)
    vmem_limit = min(int(footprint * 1.5) + (4 << 20), int(phys_vmem * 0.75))

    kernel = functools.partial(
        _rmsnorm_kernel, eps=eps, inv_d=1.0 / emb_dim, has_shift=has_shift)

    row_spec = pl.BlockSpec((row_tile, emb_dim), lambda i: (i, 0))
    vec_spec = pl.BlockSpec((1, emb_dim), lambda i: (0, 0))

    in_specs = [row_spec, vec_spec]
    operands = [x2d, scale2d]
    if has_shift:
        in_specs.append(vec_spec)
        operands.append(shift.reshape(1, emb_dim).astype(jnp.float32))

    out2d = pl.pallas_call(
        kernel,
        out_shape=jax.ShapeDtypeStruct((n_rows, emb_dim), x.dtype),
        grid_spec=pltpu.PrefetchScalarGridSpec(
            num_scalar_prefetch=0,
            grid=(grid,),
            in_specs=in_specs,
            out_specs=row_spec,
        ),
        compiler_params=pltpu.CompilerParams(
            dimension_semantics=("parallel",),
            vmem_limit_bytes=vmem_limit,
        ),
    )(*operands)

    return out2d.reshape(orig_shape)


def _rmsnorm_ref(x, scale, shift=None, eps=1e-6):
    xf = x.astype(jnp.float32)
    var = jnp.mean(xf * xf, axis=-1, keepdims=True)
    y = xf * jax.lax.rsqrt(var + eps) * scale.astype(jnp.float32)
    if shift is not None:
        y = y + shift.astype(jnp.float32)
    return y.astype(x.dtype)


def _check(x, scale, shift=None, eps=1e-6, atol=1e-2, rtol=1e-2):
    out = rmsnorm(x, scale, shift, eps=eps)
    jax.block_until_ready(out)
    ref = _rmsnorm_ref(x, scale, shift, eps=eps)
    assert out.shape == x.shape and out.dtype == x.dtype
    assert jnp.allclose(out.astype(jnp.float32), ref.astype(jnp.float32),
                        atol=atol, rtol=rtol), "mismatch vs reference"
    return out


if __name__ == "__main__":
    key = jax.random.PRNGKey(0)
    k1, k2, k3, k4, k5 = jax.random.split(key, 5)

    # Case 1: bf16 input, lane-dense emb_dim (multiple of 128), bias=False.
    batch, seq, emb_dim = 2, 8, 128
    x1 = jax.random.normal(k1, (batch, seq, emb_dim), jnp.float32).astype(jnp.bfloat16)
    s1 = 1.0 + 0.1 * jax.random.normal(k2, (emb_dim,), jnp.float32)
    _check(x1, s1)

    # Case 2: fp32 input, narrow emb_dim, non-divisible row count (exercises the
    # Pallas-masked partial tail block) plus the bias/shift path.
    x2 = jax.random.normal(k3, (3, 5, 32), jnp.float32)
    s2 = 1.0 + 0.1 * jax.random.normal(k4, (32,), jnp.float32)
    b2 = 0.05 * jax.random.normal(k5, (32,), jnp.float32)
    _check(x2, s2, b2, atol=1e-5, rtol=1e-5)

    # Case 3: enough rows for a multi-step grid (>= 8 steps; DMA/compute overlap).
    x3 = jax.random.normal(k1, (2, 128, 128), jnp.float32).astype(jnp.bfloat16)
    _check(x3, s1)

    print("KERNEL_OK")
</pallas_src>

<mosaic_0001>
module attributes {stable_mosaic.version = 11 : i64} {
  func.func @_rmsnorm_kernel(%arg0: i32, %arg1: memref<16x128xbf16, #tpu.memory_space<vmem>>, %arg2: memref<1x128xf32, #tpu.memory_space<vmem>>, %arg3: memref<16x128xbf16, #tpu.memory_space<vmem>>) attributes {dimension_semantics = [#tpu.dimension_semantics<parallel>], iteration_bounds = array<i64: 1>, scalar_prefetch = 0 : i64, scratch_operands = 0 : i64, tpu.core_type = #tpu.core_type<tc>, window_params = [{transform_indices = @transform_0, window_bounds = array<i64: 16, 128>}, {pipeline_mode = #tpu.pipeline_mode<synchronous>, transform_indices = @transform_1, window_bounds = array<i64: 1, 128>}, {transform_indices = @transform_2, window_bounds = array<i64: 16, 128>}]} {
    %c0 = arith.constant 0 : index
    %c0_0 = arith.constant 0 : index
    %0 = vector.load %arg1[%c0, %c0_0] : memref<16x128xbf16, #tpu.memory_space<vmem>>, vector<16x128xbf16>
    %1 = arith.extf %0 : vector<16x128xbf16> to vector<16x128xf32>
    %2 = arith.mulf %1, %1 : vector<16x128xf32>
    %cst = arith.constant dense<0.000000e+00> : vector<16xf32>
    %3 = vector.multi_reduction <add>, %2, %cst [1] : vector<16x128xf32> to vector<16xf32>
    %4 = vector.shape_cast %3 : vector<16xf32> to vector<16x1xf32>
    %cst_1 = arith.constant 7.812500e-03 : f32
    %5 = vector.broadcast %cst_1 : f32 to vector<16x1xf32>
    %6 = arith.mulf %4, %5 : vector<16x1xf32>
    %cst_2 = arith.constant 9.99999997E-7 : f32
    %7 = vector.broadcast %cst_2 : f32 to vector<16x1xf32>
    %8 = arith.addf %6, %7 : vector<16x1xf32>
    %9 = math.rsqrt %8 : vector<16x1xf32>
    %10 = vector.broadcast %9 : vector<16x1xf32> to vector<16x128xf32>
    %11 = arith.mulf %1, %10 : vector<16x128xf32>
    %c0_3 = arith.constant 0 : index
    %c0_4 = arith.constant 0 : index
    %12 = vector.load %arg2[%c0_3, %c0_4] : memref<1x128xf32, #tpu.memory_space<vmem>>, vector<1x128xf32>
    %13 = vector.broadcast %12 : vector<1x128xf32> to vector<16x128xf32>
    %14 = arith.mulf %11, %13 : vector<16x128xf32>
    %15 = arith.truncf %14 : vector<16x128xf32> to vector<16x128xbf16>
    %c0_5 = arith.constant 0 : index
    %c0_6 = arith.constant 0 : index
    %16 = vector.load %arg3[%c0_5, %c0_6] : memref<16x128xbf16, #tpu.memory_space<vmem>>, vector<16x128xbf16>
    tpu.vector_store %arg3[%c0_5, %c0_6], %15 {strides = array<i32>} : memref<16x128xbf16, #tpu.memory_space<vmem>>, vector<16x128xbf16>,
    return
  }
  func.func @transform_0(%arg0: i32) -> (i32, i32) {
    %c0_i32 = arith.constant 0 : i32
    %c0_i32_0 = arith.constant 0 : i32
    return %arg0, %c0_i32 : i32, i32
  }
  func.func @transform_1(%arg0: i32) -> (i32, i32) {
    %c0_i32 = arith.constant 0 : i32
    %c0_i32_0 = arith.constant 0 : i32
    %c0_i32_1 = arith.constant 0 : i32
    return %c0_i32, %c0_i32_0 : i32, i32
  }
  func.func @transform_2(%arg0: i32) -> (i32, i32) {
    %c0_i32 = arith.constant 0 : i32
    %c0_i32_0 = arith.constant 0 : i32
    return %arg0, %c0_i32 : i32, i32
  }
}

</mosaic_0001>

<llo_original>
// kernel: tpu_custom_call.1
$region0: #{tpu_custom_call.1}
  #allocation0 [shape = 'u32[]', space=smem, size = 0x4, offset = 0x4, fixed_abs, tag = 'smem constant byte address 0x4 - core index']
  #allocation1 [shape = 'u32[144,128]{1,0:T(1,128)}', space=vmem, size = 0x12000, scoped, tag = 'internal scratch']
  %s0 = inlined_call_operand.hbm [shape: bf16[16,128], index: 0, kind: input, shape index: {}]
  %s1 = inlined_call_operand.vmem [shape: f32[1,128], index: 1, kind: input, shape index: {}]
  %s2 = inlined_call_operand.hbm [shape: bf16[16,128], index: 2, kind: output, shape index: {}]
  %s3 = sld [smem:[#allocation0]]
  $region22: #{tpu_custom_call.1} parent=0
    _
  %s5 = ssub.s32 1, %s3
  %s6 = scalar_select 0, %s5, %s3
  $region1: #{tpu_custom_call.1} parent=0
    #allocation2 [shape = 'u8[4096]{0}', space=vmem, size = 0x1000, scoped, tag = 'input window, operand 0, single buffered']
    #allocation3 [shape = 's32[1]{0}', space=sflag, size = 0x4, scoped, tag = 'scoped memory for tpu_custom_call.1']
    #allocation4 [shape = 's32[1]{0}', space=sflag, size = 0x4, scoped, tag = 'scoped memory for tpu_custom_call.1']
    #allocation5 [shape = 'u8[4096]{0}', space=vmem, size = 0x1000, scoped, tag = 'output window, operand 0, single buffered']
    %7 = vsyncpa [#allocation3], 0
    %8 = vsyncpa [#allocation4], 0
    // Predicated region
    $region2: #{tpu_custom_call.1} parent=1 // pred_check
      _
    $region3: #{tpu_custom_call.1} parent=1 // pred_check_branch
      %10 = sbr.rel (0) target = $region5
    $region4: #{tpu_custom_call.1} parent=1 // pred_region
      %s12 = ssub.s32 128, 128
      %13 = vsyncadd [#allocation3], %s12
      %s14 = sshll.u32 [#allocation2], 4
      %s15 = int_to_ptr.vmem [resolvable:$true] %s14
      %20 = dma.hbm_to_vmem [thread:$0]  %s0, 128, %s15, [#allocation3], 64, 64, 4
    $region5: #{tpu_custom_call.1} parent=1 // pred_fallthru
      _
    // Predicated region
    $region6: #{tpu_custom_call.1} parent=1 // pred_check
      _
    $region7: #{tpu_custom_call.1} parent=1 // pred_check_branch
      %22 = sbr.rel (0) target = $region9
    $region8: #{tpu_custom_call.1} parent=1 // pred_region
      _
    $region9: #{tpu_custom_call.1} parent=1 // pred_fallthru
      _
    // Predicated region
    $region10: #{tpu_custom_call.1} parent=1 // pred_check
      _
    $region11: #{tpu_custom_call.1} parent=1 // pred_check_branch
      %24 = sbr.rel (0) target = $region13
    $region12: #{tpu_custom_call.1} parent=1 // pred_region
      %25 = dma.done [#allocation3], 128
    $region13: #{tpu_custom_call.1} parent=1 // pred_fallthru
      _
    %v26 = vld [vmem:[#allocation2] sm:$0xf]
    %v27 = vld [vmem:[#allocation2 + $0x4] sm:$0xf]
    %v28 = vunpack.c.l.bf16 %v26
    %v29 = vunpack.c.l.bf16 %v27
    %v30 = vmul.f32 %v28, %v28
    %v31 = vmul.f32 %v29, %v29
    %32 = vadd.xlane.f32.xlu0 %v30
    %v33 = vpop.xlane.xlu0 %32
    %34 = vadd.xlane.f32.xlu0 %v31
    %v35 = vpop.xlane.xlu0 %34
    %v36 = vmul.f32 %v33, 0.0078125
    %v37 = vmul.f32 %v35, 0.0078125
    %v38 = vadd.f32 %v36, 1e-06
    %v39 = vadd.f32 %v37, 1e-06
    %v40 = vrsqrt.pop %v38
    %v41 = vrsqrt.pop %v39
    %v42 = vmul.f32 %v28, %v40
    %v43 = vmul.f32 %v29, %v41
    %v44 = vld [vmem:[%s1] sm:$0x1]
    %v46 = vlaneseq
    %v47 = vshrl.u32 %v46, 7
    %v48 = vsub.s32 0, %v47
    %v49 = vrot.slane %v44, %v48
    %v51 = vmul.f32 %v42, %v49
    %v52 = vmul.f32 %v43, %v49
    %v53 = vpack.c.bf16 %v52, %v51
    %v55 = vunpack.c.l.b16 %v53
    %v56 = vunpack.c.h.b16 %v53
    %v57 = vpack.c.b16 %v55, %v55
    %v58 = vpack.c.b16 %v56, %v56
    %61 = vst [vmem:[#allocation5] sm:$0xf] %v57
    %62 = vst [vmem:[#allocation5 + $0x4] sm:$0xf] %v58
    // Predicated region
    $region14: #{tpu_custom_call.1} parent=1 // pred_check
      _
    $region15: #{tpu_custom_call.1} parent=1 // pred_check_branch
      %64 = sbr.rel (0) target = $region17
    $region16: #{tpu_custom_call.1} parent=1 // pred_region
      %s66 = ssub.s32 128, 128
      %67 = vsyncadd [#allocation4], %s66
      %s68 = sshll.u32 [#allocation5], 4
      %s69 = int_to_ptr.vmem [resolvable:$true] %s68
      %74 = dma.vmem_to_hbm [thread:$0]  %s69, 128, %s2, [#allocation4], 64, 64, 4
    $region17: #{tpu_custom_call.1} parent=1 // pred_fallthru
      _
    // Predicated region
    $region18: #{tpu_custom_call.1} parent=1 // pred_check
      _
    $region19: #{tpu_custom_call.1} parent=1 // pred_check_branch
      %76 = sbr.rel (0) target = $region21
    $region20: #{tpu_custom_call.1} parent=1 // pred_region
      %77 = dma.done [#allocation4], 128
    $region21: #{tpu_custom_call.1} parent=1 // pred_fallthru
      _
    %78 = vsyncpa [#allocation3], 1
    %79 = vsyncpa [#allocation4], 1

</llo_original>
